<compile_context>
chip_gen: v5e
topology: v5e:2x2
jax: 0.10.0
libtpu: 0.0.40
codegen_flags: <defaults>
</compile_context>

<pallas_src>
import functools
import math

import jax
import jax.numpy as jnp
from jax.experimental import pallas as pl
from jax.experimental.pallas import tpu as pltpu


def _round_up(x, m):
    return ((x + m - 1) // m) * m


def _tpu_budgets():
    """Generation-aware (target_block_bytes, vmem_limit_bytes)."""
    try:
        vmem = int(pltpu.get_tpu_info().vmem_capacity_bytes)
    except Exception:
        vmem = 0
    if vmem >= 100 * 1024 * 1024:      # v5e / v6e: 128 MiB physical VMEM
        return 8 * 1024 * 1024, 80 * 1024 * 1024
    if vmem >= 48 * 1024 * 1024:       # v7x: 64 MiB physical VMEM
        return 8 * 1024 * 1024, 44 * 1024 * 1024
    return 4 * 1024 * 1024, 32 * 1024 * 1024   # unknown: conservative


def _ssf_affine_kernel(x_ref, scale_ref, shift_ref, o_ref):
    # x_ref: (tm, tc) or (tb, tcc, tn); scale/shift broadcast along the
    # non-channel axes.  FMA in f32, cast only the output.
    x = x_ref[...].astype(jnp.float32)
    s = scale_ref[...].astype(jnp.float32)
    t = shift_ref[...].astype(jnp.float32)
    o_ref[...] = (x * s + t).astype(o_ref.dtype)


def _ssf_2d(x2, scale1, shift1, out_dtype, alias, block_bytes, vmem_limit):
    """y[m, c] = x[m, c] * scale[c] + shift[c]  (channels on lanes)."""
    M, C = x2.shape
    itemsize = max(jnp.dtype(x2.dtype).itemsize, jnp.dtype(out_dtype).itemsize)
    sub = max(8, 32 // jnp.dtype(x2.dtype).itemsize)  # 8 f32, 16 bf16, 32 int8

    # ---- Lane-density fix: fold rows into lanes when C < 128 (free reshape).
    if C < 128 and M > 1:
        k = 128 // math.gcd(C, 128)        # smallest k with (k*C) % 128 == 0
        if k > 1 and M % k == 0:
            x2 = x2.reshape(M // k, k * C)
            scale1 = jnp.tile(scale1, k)
            shift1 = jnp.tile(shift1, k)
            M, C = x2.shape
        # TODO(synk): if M % k != 0 the lane axis stays narrower than 128.

    # ---- Lane tile over C.
    if C >= 128:
        tc_cap = max(128, (block_bytes // (sub * itemsize)) // 128 * 128)
        tc = min(_round_up(C, 128), tc_cap)
        if tc >= C:
            tc = C          # full-extent block: no over-rounded tail lanes
    else:
        tc = C

    # ---- Sublane tile over M.
    if M <= sub:
        tm = M
    else:
        tm_budget = max(sub, block_bytes // (tc * itemsize))
        tm = min(_round_up(M, sub), (tm_budget // sub) * sub)
        tm = max(tm, sub)
        if tm >= M:
            tm = M

    # ---- v7x: give both TensorCores work when possible.
    if pl.cdiv(M, tm) * pl.cdiv(C, tc) < 2:
        if M > sub:
            half_m = _round_up(pl.cdiv(M, 2), sub)
            if half_m < M:
                tm = half_m
        elif C >= 256:
            half_c = _round_up(pl.cdiv(C, 2), 128)
            if half_c < C:
                tc = half_c

    grid = (pl.cdiv(M, tm), pl.cdiv(C, tc))
    return pl.pallas_call(
        _ssf_affine_kernel,
        out_shape=jax.ShapeDtypeStruct((M, C), out_dtype),
        grid_spec=pltpu.PrefetchScalarGridSpec(
            num_scalar_prefetch=0,
            grid=grid,
            in_specs=[
                pl.BlockSpec((tm, tc), lambda i, j: (i, j)),
                pl.BlockSpec((1, tc), lambda i, j: (0, j)),
                pl.BlockSpec((1, tc), lambda i, j: (0, j)),
            ],
            out_specs=pl.BlockSpec((tm, tc), lambda i, j: (i, j)),
        ),
        compiler_params=pltpu.CompilerParams(
            dimension_semantics=("parallel", "parallel"),
            vmem_limit_bytes=vmem_limit,
        ),
        input_output_aliases=alias,
    )(x2, scale1.reshape(1, C), shift1.reshape(1, C))


def _ssf_3d(x3, scale1, shift1, out_dtype, alias, block_bytes, vmem_limit):
    """y[b, c, n] = x[b, c, n] * scale[c] + shift[c]  (trailing dims on lanes)."""
    B, C, N = x3.shape
    itemsize = max(jnp.dtype(x3.dtype).itemsize, jnp.dtype(out_dtype).itemsize)
    sub = max(8, 32 // jnp.dtype(x3.dtype).itemsize)

    # ---- Channel (sublane) tile; add a C grid axis when C alone blows budget.
    if C * 128 * itemsize <= block_bytes:
        tcc = C
    else:
        tcc = max(sub, (block_bytes // (128 * itemsize)) // sub * sub)

    # ---- Lane tile over N (prefer full extent: unmasked dense stores).
    if N <= 128 or tcc * N * itemsize <= block_bytes:
        tn = N
    else:
        tn_cap = max(128, (block_bytes // (tcc * itemsize)) // 128 * 128)
        tn = min(_round_up(N, 128), tn_cap)
        if tn >= N:
            tn = N

    # ---- Leading tile over B (no (8,128) constraint on the leading dim).
    tb = max(1, block_bytes // (tcc * tn * itemsize))
    tb = min(tb, B)

    # ---- v7x: give both TensorCores work when possible.
    if pl.cdiv(B, tb) * pl.cdiv(C, tcc) * pl.cdiv(N, tn) < 2:
        if B >= 2:
            tb = pl.cdiv(B, 2)
        elif C > sub:
            half_c = _round_up(pl.cdiv(C, 2), sub)
            if half_c < C:
                tcc = half_c
        elif N > 256:
            half_n = _round_up(pl.cdiv(N, 2), 128)
            if half_n < N:
                tn = half_n

    grid = (pl.cdiv(B, tb), pl.cdiv(C, tcc), pl.cdiv(N, tn))
    return pl.pallas_call(
        _ssf_affine_kernel,
        out_shape=jax.ShapeDtypeStruct((B, C, N), out_dtype),
        grid_spec=pltpu.PrefetchScalarGridSpec(
            num_scalar_prefetch=0,
            grid=grid,
            in_specs=[
                pl.BlockSpec((tb, tcc, tn), lambda b, c, j: (b, c, j)),
                pl.BlockSpec((1, tcc, 1), lambda b, c, j: (0, c, 0)),
                pl.BlockSpec((1, tcc, 1), lambda b, c, j: (0, c, 0)),
            ],
            out_specs=pl.BlockSpec((tb, tcc, tn), lambda b, c, j: (b, c, j)),
        ),
        compiler_params=pltpu.CompilerParams(
            dimension_semantics=("parallel", "parallel", "parallel"),
            vmem_limit_bytes=vmem_limit,
        ),
        input_output_aliases=alias,
    )(x3, scale1.reshape(1, C, 1), shift1.reshape(1, C, 1))


@functools.partial(jax.jit, static_argnames=("dim", "donate_x", "out_dtype"))
def ssf_forward(x, scale, shift, dim=-1, donate_x=False, out_dtype=None):
    """Applies y = x * scale + shift broadcast along axis `dim` (SSF.forward)."""
    ndim = x.ndim
    d = dim % ndim
    C = x.shape[d]
    assert scale.shape == (C,) and shift.shape == (C,)

    if out_dtype is None:
        # Matches PyTorch type promotion (f32 params -> f32 output).
        out_dtype = jnp.result_type(x.dtype, scale.dtype, shift.dtype)
    out_dtype = jnp.dtype(out_dtype)

    block_bytes, vmem_limit = _tpu_budgets()
    sub = max(8, 32 // jnp.dtype(x.dtype).itemsize)

    alias = {}
    if donate_x and jnp.dtype(x.dtype) == out_dtype:
        alias = {0: 0}

    trailing = 1
    for s in x.shape[d + 1:]:
        trailing *= s
    leading = 1
    for s in x.shape[:d]:
        leading *= s

    if d == ndim - 1 or trailing == 1:
        # SSF axis is (effectively) the last axis: channels on lanes.
        out = _ssf_2d(x.reshape(leading, C), scale, shift, out_dtype,
                      alias, block_bytes, vmem_limit)
    elif C < sub:
        # Tiny interior channel axis: collapse (C, N) onto lanes so vregs and
        # DMA rows are fully packed; per-channel params expand to C*N values.
        out = _ssf_2d(x.reshape(leading, C * trailing),
                      jnp.repeat(scale, trailing), jnp.repeat(shift, trailing),
                      out_dtype, alias, block_bytes, vmem_limit)
    else:
        # Interior channel axis with enough channels to fill sublanes.
        out = _ssf_3d(x.reshape(leading, C, trailing), scale, shift, out_dtype,
                      alias, block_bytes, vmem_limit)
    return out.reshape(x.shape)


if __name__ == "__main__":
    key = jax.random.PRNGKey(0)
    k_x, k_scale, k_shift = jax.random.split(key, 3)

    # Small NCHW-style input; SSF applied over the channel axis (dim=1).
    B, C, H, W = 2, 4, 16, 16
    x = jax.random.normal(k_x, (B, C, H, W), dtype=jnp.float32)

    # Deterministic parameter init matching nn.init.normal_:
    #   scale ~ N(1.0, 0.02), shift ~ N(0.0, 0.02)
    scale = 1.0 + 0.02 * jax.random.normal(k_scale, (C,), dtype=jnp.float32)
    shift = 0.02 * jax.random.normal(k_shift, (C,), dtype=jnp.float32)

    # Channel-axis case (interior dim, tiny C -> collapsed lane-dense layout).
    y = jax.block_until_ready(ssf_forward(x, scale, shift, dim=1))
    ref = jnp.swapaxes(jnp.swapaxes(x, 1, -1) * scale + shift, 1, -1)
    assert jnp.allclose(y, ref, atol=1e-6, rtol=1e-6)

    # Default dim=-1 case (C=16 < 128 -> row-folding into 128 lanes).
    scale_w = 1.0 + 0.02 * jax.random.normal(k_scale, (W,), dtype=jnp.float32)
    shift_w = 0.02 * jax.random.normal(k_shift, (W,), dtype=jnp.float32)
    y_last = jax.block_until_ready(ssf_forward(x, scale_w, shift_w, dim=-1))
    ref_last = x * scale_w + shift_w
    assert jnp.allclose(y_last, ref_last, atol=1e-6, rtol=1e-6)

    # Interior dim with trailing extent not a multiple of 128 (partial lane
    # blocks / full-extent tiles, no wrapper padding).
    x2 = jax.random.normal(k_x, (2, 4, 12, 25), dtype=jnp.float32)
    y2 = jax.block_until_ready(ssf_forward(x2, scale, shift, dim=1))
    ref2 = jnp.swapaxes(jnp.swapaxes(x2, 1, -1) * scale + shift, 1, -1)
    assert jnp.allclose(y2, ref2, atol=1e-6, rtol=1e-6)

    # Interior dim with C >= sublane multiple (exercises the 3-D path).
    x3 = jax.random.normal(k_x, (2, 16, 8, 40), dtype=jnp.float32)
    scale16 = 1.0 + 0.02 * jax.random.normal(k_scale, (16,), dtype=jnp.float32)
    shift16 = 0.02 * jax.random.normal(k_shift, (16,), dtype=jnp.float32)
    y3 = jax.block_until_ready(ssf_forward(x3, scale16, shift16, dim=1))
    ref3 = jnp.swapaxes(jnp.swapaxes(x3, 1, -1) * scale16 + shift16, 1, -1)
    assert jnp.allclose(y3, ref3, atol=1e-6, rtol=1e-6)

    print("KERNEL_OK")
</pallas_src>

<mosaic_0001>
module attributes {stable_mosaic.version = 11 : i64} {
  func.func @_ssf_affine_kernel(%arg0: i32, %arg1: i32, %arg2: memref<2x512xf32, #tpu.memory_space<vmem>>, %arg3: memref<1x512xf32, #tpu.memory_space<vmem>>, %arg4: memref<1x512xf32, #tpu.memory_space<vmem>>, %arg5: memref<2x512xf32, #tpu.memory_space<vmem>>) attributes {dimension_semantics = [#tpu.dimension_semantics<parallel>, #tpu.dimension_semantics<parallel>], iteration_bounds = array<i64: 1, 2>, scalar_prefetch = 0 : i64, scratch_operands = 0 : i64, tpu.core_type = #tpu.core_type<tc>, window_params = [{transform_indices = @transform_0, window_bounds = array<i64: 2, 512>}, {transform_indices = @transform_1, window_bounds = array<i64: 1, 512>}, {transform_indices = @transform_2, window_bounds = array<i64: 1, 512>}, {transform_indices = @transform_3, window_bounds = array<i64: 2, 512>}]} {
    %c0 = arith.constant 0 : index
    %c0_0 = arith.constant 0 : index
    %0 = vector.load %arg2[%c0, %c0_0] : memref<2x512xf32, #tpu.memory_space<vmem>>, vector<2x512xf32>
    %c0_1 = arith.constant 0 : index
    %c0_2 = arith.constant 0 : index
    %1 = vector.load %arg3[%c0_1, %c0_2] : memref<1x512xf32, #tpu.memory_space<vmem>>, vector<1x512xf32>
    %c0_3 = arith.constant 0 : index
    %c0_4 = arith.constant 0 : index
    %2 = vector.load %arg4[%c0_3, %c0_4] : memref<1x512xf32, #tpu.memory_space<vmem>>, vector<1x512xf32>
    %3 = vector.broadcast %1 : vector<1x512xf32> to vector<2x512xf32>
    %4 = arith.mulf %0, %3 : vector<2x512xf32>
    %5 = vector.broadcast %2 : vector<1x512xf32> to vector<2x512xf32>
    %6 = arith.addf %4, %5 : vector<2x512xf32>
    %c0_5 = arith.constant 0 : index
    %c0_6 = arith.constant 0 : index
    %7 = vector.load %arg5[%c0_5, %c0_6] : memref<2x512xf32, #tpu.memory_space<vmem>>, vector<2x512xf32>
    tpu.vector_store %arg5[%c0_5, %c0_6], %6 {strides = array<i32>} : memref<2x512xf32, #tpu.memory_space<vmem>>, vector<2x512xf32>,
    return
  }
  func.func @transform_0(%arg0: i32, %arg1: i32) -> (i32, i32) {
    %c0_i32 = arith.constant 0 : i32
    return %arg0, %arg1 : i32, i32
  }
  func.func @transform_1(%arg0: i32, %arg1: i32) -> (i32, i32) {
    %c0_i32 = arith.constant 0 : i32
    %c0_i32_0 = arith.constant 0 : i32
    return %c0_i32, %arg1 : i32, i32
  }
  func.func @transform_2(%arg0: i32, %arg1: i32) -> (i32, i32) {
    %c0_i32 = arith.constant 0 : i32
    %c0_i32_0 = arith.constant 0 : i32
    return %c0_i32, %arg1 : i32, i32
  }
  func.func @transform_3(%arg0: i32, %arg1: i32) -> (i32, i32) {
    %c0_i32 = arith.constant 0 : i32
    return %arg0, %arg1 : i32, i32
  }
}

</mosaic_0001>

<llo_original>
// kernel: ssf_forward.1
$region0: #{ssf_forward.1}
  #allocation0 [shape = 'u32[]', space=smem, size = 0x4, offset = 0x4, fixed_abs, tag = 'smem constant byte address 0x4 - core index']
  #allocation1 [shape = 'u32[72,128]{1,0:T(1,128)}', space=vmem, size = 0x9000, scoped, tag = 'internal scratch']
  %s0 = inlined_call_operand.vmem [shape: f32[2,1024], index: 0, kind: input, shape index: {}]
  %s1 = inlined_call_operand.vmem [shape: f32[1,1024], index: 1, kind: input, shape index: {}]
  %s2 = inlined_call_operand.vmem [shape: f32[1,1024], index: 2, kind: input, shape index: {}]
  %s3 = inlined_call_operand.vmem [shape: f32[2,1024], index: 3, kind: output, shape index: {}]
  %s4 = sld [smem:[#allocation0]]
  $region45: #{ssf_forward.1} parent=0
    _
  %s6 = ssub.s32 1, %s4
  %s7 = scalar_select 0, %s6, %s4
  loop: start=0, step=1, limit=4
  $region2: #{ssf_forward.1} parent=0 // loop_pre_header
    _
  $region3: #{ssf_forward.1} parent=0 // loop_header
    %s9 = sphi 0, %s13
    %p10 = scmp.ge.s32.totalorder %s9, 4
    %s16 = sphi 0, %s28
    %s17 = sphi 0, %s24
    %s18 = sphi 0, %s16
    %s19 = sphi 0, %s17
    %s20 = sphi 0, %s18
    %s21 = sphi 0, %s19
    %s33 = sphi 0, %s35
    %s36 = sphi 0, %s33
    %s37 = sphi 0, %s36
    %s53 = sphi 0, %s37
    %s59 = sphi 0, %s61
    %s62 = sphi 0, %s59
    %s63 = sphi 0, %s62
    %s79 = sphi 0, %s63
    %s85 = sphi 0, %s87
    %s88 = sphi 0, %s85
    %s89 = sphi 0, %s88
    %s105 = sphi 0, %s89
    %s113 = sphi 0, %s115
    %s116 = sphi 0, %s113
    %s117 = sphi 0, %s116
    %s133 = sphi 0, %s117
  $region4: #{ssf_forward.1} parent=0 // loop_header_branch
    %12 = sbr.rel (%p10) target = $region8
  $region5: #{ssf_forward.1} parent=0 // loop_body
    %s14 = ssub.s32 %s9, 1
    %s15 = ssub.s32 %s9, 2
    %s22 = sadd.s32 1, %s17
    %p23 = scmp.ge.s32.totalorder %s22, 2
    %s24 = scalar_select %p23, 0, %s22
    %s25 = sadd.s32 1, %s16
    %s26 = scalar_select %p23, %s25, %s16
    %p27 = scmp.ge.s32.totalorder %s26, 1
    %s28 = scalar_select %p27, 0, %s26
    %s29 = ssub.s32 %s16, %s28
    %s30 = ssub.s32 %s17, %s24
    %s31 = sor.u32 %s29, %s30
    %p32 = scmp.eq.s32.totalorder %s31, 0
    %s34 = sadd.s32 %s33, 1
    %s35 = scalar_select %p32, %s33, %s34
    %p38 = pneg %p32
    %p39 = scmp.eq.s32.totalorder %s9, 1
    %p40 = por %p38, %p39
    %p41 = scmp.ne.s32.totalorder %s33, %s36
    %p42 = scmp.eq.s32.totalorder %s9, 0
    %p43 = por %p41, %p42
    %p44 = scmp.ne.s32.totalorder %s33, %s36
    %p45 = scmp.eq.s32.totalorder %s14, 1
    %p46 = por %p44, %p45
    %p47 = scmp.ne.s32.totalorder %s36, %s37
    %p48 = scmp.eq.s32.totalorder %s14, 0
    %p49 = por %p47, %p48
    %p50 = scmp.ne.s32.totalorder %s36, %s37
    %p51 = scmp.eq.s32.totalorder %s15, 1
    %p52 = por %p50, %p51
    %p54 = scmp.ne.s32.totalorder %s37, %s53
    %p55 = scmp.eq.s32.totalorder %s15, 0
    %p56 = por %p54, %p55
    %s57 = ssub.s32 %s17, %s24
    %p58 = scmp.eq.s32.totalorder %s57, 0
    %s60 = sadd.s32 %s59, 1
    %s61 = scalar_select %p58, %s59, %s60
    %p64 = pneg %p58
    %p65 = scmp.eq.s32.totalorder %s9, 1
    %p66 = por %p64, %p65
    %p67 = scmp.ne.s32.totalorder %s59, %s62
    %p68 = scmp.eq.s32.totalorder %s9, 0
    %p69 = por %p67, %p68
    %p70 = scmp.ne.s32.totalorder %s59, %s62
    %p71 = scmp.eq.s32.totalorder %s14, 1
    %p72 = por %p70, %p71
    %p73 = scmp.ne.s32.totalorder %s62, %s63
    %p74 = scmp.eq.s32.totalorder %s14, 0
    %p75 = por %p73, %p74
    %p76 = scmp.ne.s32.totalorder %s62, %s63
    %p77 = scmp.eq.s32.totalorder %s15, 1
    %p78 = por %p76, %p77
    %p80 = scmp.ne.s32.totalorder %s63, %s79
    %p81 = scmp.eq.s32.totalorder %s15, 0
    %p82 = por %p80, %p81
    %s83 = ssub.s32 %s17, %s24
    %p84 = scmp.eq.s32.totalorder %s83, 0
    %s86 = sadd.s32 %s85, 1
    %s87 = scalar_select %p84, %s85, %s86
    %p90 = pneg %p84
    %p91 = scmp.eq.s32.totalorder %s9, 1
    %p92 = por %p90, %p91
    %p93 = scmp.ne.s32.totalorder %s85, %s88
    %p94 = scmp.eq.s32.totalorder %s9, 0
    %p95 = por %p93, %p94
    %p96 = scmp.ne.s32.totalorder %s85, %s88
    %p97 = scmp.eq.s32.totalorder %s14, 1
    %p98 = por %p96, %p97
    %p99 = scmp.ne.s32.totalorder %s88, %s89
    %p100 = scmp.eq.s32.totalorder %s14, 0
    %p101 = por %p99, %p100
    %p102 = scmp.ne.s32.totalorder %s88, %s89
    %p103 = scmp.eq.s32.totalorder %s15, 1
    %p104 = por %p102, %p103
    %p106 = scmp.ne.s32.totalorder %s89, %s105
    %p107 = scmp.eq.s32.totalorder %s15, 0
    %p108 = por %p106, %p107
    %s109 = ssub.s32 %s16, %s28
    %s110 = ssub.s32 %s17, %s24
    %s111 = sor.u32 %s109, %s110
    %p112 = scmp.eq.s32.totalorder %s111, 0
    %s114 = sadd.s32 %s113, 1
    %s115 = scalar_select %p112, %s113, %s114
    %p118 = pneg %p112
    %p119 = scmp.eq.s32.totalorder %s9, 1
    %p120 = por %p118, %p119
    %p121 = scmp.ne.s32.totalorder %s113, %s116
    %p122 = scmp.eq.s32.totalorder %s9, 0
    %p123 = por %p121, %p122
    %p124 = scmp.ne.s32.totalorder %s113, %s116
    %p125 = scmp.eq.s32.totalorder %s14, 1
    %p126 = por %p124, %p125
    %p127 = scmp.ne.s32.totalorder %s116, %s117
    %p128 = scmp.eq.s32.totalorder %s14, 0
    %p129 = por %p127, %p128
    %p130 = scmp.ne.s32.totalorder %s116, %s117
    %p131 = scmp.eq.s32.totalorder %s15, 1
    %p132 = por %p130, %p131
    %p134 = scmp.ne.s32.totalorder %s117, %s133
    %p135 = scmp.eq.s32.totalorder %s15, 0
    %p136 = por %p134, %p135
    %p137 = scmp.le.s32.totalorder 1, %s9
    %p138 = scmp.lt.s32.totalorder %s9, 3
    %p139 = pnand %p137, %p138
    %p140 = pneg %p139
    // Predicated region
    $region9: #{ssf_forward.1} parent=5 // pred_check
      _
    $region10: #{ssf_forward.1} parent=5 // pred_check_branch
      %142 = sbr.rel (%p139) target = $region12
    $region11: #{ssf_forward.1} parent=5 // pred_region
      %s143 = ssub.s32 %s9, 1
    $region12: #{ssf_forward.1} parent=5 // pred_fallthru
      _
    %p144 = scmp.lt.s32.totalorder %s9, 2
    // Predicated region
    $region13: #{ssf_forward.1} parent=5 // pred_check
      %p145 = pneg %p144
    $region14: #{ssf_forward.1} parent=5 // pred_check_branch
      %147 = sbr.rel (%p145) target = $region16
    $region15: #{ssf_forward.1} parent=5 // pred_region
      // Predicated region
      $region17: #{ssf_forward.1} parent=15 // pred_check
        %p148 = pneg %p43
      $region18: #{ssf_forward.1} parent=15 // pred_check_branch
        %150 = sbr.rel (%p148) target = $region20
      $region19: #{ssf_forward.1} parent=15 // pred_region
        %s151 = smul.u32 4, %s17
        %p152 = scmp.lt.s32.totalorder %s16, 0
        %s153 = scalar_select %p152, %s16, 0
        %p154 = scmp.lt.s32.totalorder %s151, 7
        %s155 = scalar_select %p154, %s151, 7
        %s156 = smul.addr %s153, 8
        %s157 = sadd.s32 %s155, %s156
        %s158 = smul.addr %s157, 2
        %s159 = scalar_lea.vmem %s0, %s158
        %s160 = smul.u32 4, %s17
      $region20: #{ssf_forward.1} parent=15 // pred_fallthru
        _
      // Predicated region
      $region21: #{ssf_forward.1} parent=15 // pred_check
        %p161 = pneg %p69
      $region22: #{ssf_forward.1} parent=15 // pred_check_branch
        %163 = sbr.rel (%p161) target = $region24
      $region23: #{ssf_forward.1} parent=15 // pred_region
        %s164 = smul.u32 4, %s17
        %p165 = scmp.lt.s32.totalorder %s164, 7
        %s166 = scalar_select %p165, %s164, 7
        %s167 = scalar_lea.vmem %s1, %s166
        %s168 = smul.u32 4, %s17
      $region24: #{ssf_forward.1} parent=15 // pred_fallthru
        _
      // Predicated region
      $region25: #{ssf_forward.1} parent=15 // pred_check
        %p169 = pneg %p95
      $region26: #{ssf_forward.1} parent=15 // pred_check_branch
        %171 = sbr.rel (%p169) target = $region28
      $region27: #{ssf_forward.1} parent=15 // pred_region
        %s172 = smul.u32 4, %s17
        %p173 = scmp.lt.s32.totalorder %s172, 7
        %s174 = scalar_select %p173, %s172, 7
        %s175 = scalar_lea.vmem %s2, %s174
        %s176 = smul.u32 4, %s17
      $region28: #{ssf_forward.1} parent=15 // pred_fallthru
        _
    $region16: #{ssf_forward.1} parent=5 // pred_fallthru
      _
    %p177 = scmp.le.s32.totalorder 1, %s9
    %p178 = scmp.lt.s32.totalorder %s9, 3
    %p179 = pnand %p177, %p178
    %p180 = pneg %p179
    // Predicated region
    $region29: #{ssf_forward.1} parent=5 // pred_check
      _
    $region30: #{ssf_forward.1} parent=5 // pred_check_branch
      %182 = sbr.rel (%p179) target = $region32
    $region31: #{ssf_forward.1} parent=5 // pred_region
      %s183 = ssub.s32 %s9, 1
      %s184 = smul.u32 4, %s19
      %p185 = scmp.lt.s32.totalorder %s18, 0
      %s186 = scalar_select %p185, %s18, 0
      %p187 = scmp.lt.s32.totalorder %s184, 7
      %s188 = scalar_select %p187, %s184, 7
      %s189 = smul.addr %s186, 8
      %s190 = sadd.s32 %s188, %s189
      %s191 = smul.addr %s190, 2
      %s192 = scalar_lea.vmem %s0, %s191
      %p193 = pneg %p49
      %p194 = pneg %p46
      %s195 = smul.u32 4, %s19
      %p196 = scmp.lt.s32.totalorder %s195, 7
      %s197 = scalar_select %p196, %s195, 7
      %s198 = scalar_lea.vmem %s1, %s197
      %p199 = pneg %p75
      %p200 = pneg %p72
      %s201 = smul.u32 4, %s19
      %p202 = scmp.lt.s32.totalorder %s201, 7
      %s203 = scalar_select %p202, %s201, 7
      %s204 = scalar_lea.vmem %s2, %s203
      %p205 = pneg %p101
      %p206 = pneg %p98
      %p207 = pneg %p129
      %p208 = pneg %p126
      %s209 = smul.u32 4, %s19
      %p210 = scmp.lt.s32.totalorder %s18, 0
      %s211 = scalar_select %p210, %s18, 0
      %p212 = scmp.lt.s32.totalorder %s209, 7
      %s213 = scalar_select %p212, %s209, 7
      %s214 = smul.addr %s211, 8
      %s215 = sadd.s32 %s213, %s214
      %s216 = smul.addr %s215, 2
      %s217 = scalar_lea.vmem %s3, %s216
      %s218 = smul.u32 4, %s19
      %p219 = scmp.lt.s32.totalorder %s18, 0
      %s220 = scalar_select %p219, %s18, 0
      %p221 = scmp.lt.s32.totalorder %s218, 7
      %s222 = scalar_select %p221, %s218, 7
      %s223 = smul.addr %s220, 8
      %s224 = sadd.s32 %s222, %s223
      %s225 = smul.addr %s224, 2
      %s226 = scalar_lea.vmem %s0, %s225
      %s227 = smul.u32 4, %s19
      %s228 = smul.u32 4, %s19
      %p229 = scmp.lt.s32.totalorder %s228, 7
      %s230 = scalar_select %p229, %s228, 7
      %s231 = scalar_lea.vmem %s1, %s230
      %s232 = smul.u32 4, %s19
      %s233 = smul.u32 4, %s19
      %p234 = scmp.lt.s32.totalorder %s233, 7
      %s235 = scalar_select %p234, %s233, 7
      %s236 = scalar_lea.vmem %s2, %s235
      %s237 = smul.u32 4, %s19
      %s238 = smul.u32 4, %s19
      %p239 = scmp.lt.s32.totalorder %s18, 0
      %s240 = scalar_select %p239, %s18, 0
      %p241 = scmp.lt.s32.totalorder %s238, 7
      %s242 = scalar_select %p241, %s238, 7
      %s243 = smul.addr %s240, 8
      %s244 = sadd.s32 %s242, %s243
      %s245 = smul.addr %s244, 2
      %s246 = scalar_lea.vmem %s3, %s245
      %s247 = smul.u32 4, %s19
      %v248 = vld [vmem:[%s226] sm:$0xff]
      %v249 = vld [vmem:[%s231] sm:$0xf]
      %v250 = vld [vmem:[%s236] sm:$0xf]
      %v252 = vperm.slane %v249, 0
      %v253 = vperm.slane %v249, 1
      %v254 = vperm.slane %v249, 2
      %v255 = vperm.slane %v249, 3
      %v256 = vrot.slane %v253, 6
      %v257 = vrot.slane %v254, 4
      %v258 = vrot.slane %v255, 2
      %vm259 = vcmask 1041408
      %v260 = vsel %vm259, %v252, %v256
      %vm261 = vcmask 1045508
      %v262 = vsel %vm261, %v257, %v258
      %vm263 = vcmask 1043456
      %v264 = vsel %vm263, %v260, %v262
      %v266 = vmul.f32 %v248, %v264
      %v268 = vperm.slane %v250, 0
      %v269 = vperm.slane %v250, 1
      %v270 = vperm.slane %v250, 2
      %v271 = vperm.slane %v250, 3
      %v272 = vrot.slane %v269, 6
      %v273 = vrot.slane %v270, 4
      %v274 = vrot.slane %v271, 2
      %v275 = vsel %vm259, %v268, %v272
      %v276 = vsel %vm261, %v273, %v274
      %v277 = vsel %vm263, %v275, %v276
      %v279 = vadd.f32 %v266, %v277
      %280 = vst [vmem:[%s246] sm:$0xff] %v279
      %s281 = smul.u32 4, %s19
      %p282 = scmp.lt.s32.totalorder %s18, 0
      %s283 = scalar_select %p282, %s18, 0
      %p284 = scmp.lt.s32.totalorder %s281, 7
      %s285 = scalar_select %p284, %s281, 7
      %s286 = smul.addr %s283, 8
      %s287 = sadd.s32 %s285, %s286
      %s288 = smul.addr %s287, 2
      %s289 = scalar_lea.vmem %s3, %s288
      // Predicated region
      $region33: #{ssf_forward.1} parent=31 // pred_check
        %p290 = pneg %p126
      $region34: #{ssf_forward.1} parent=31 // pred_check_branch
        %292 = sbr.rel (%p290) target = $region36
      $region35: #{ssf_forward.1} parent=31 // pred_region
        %s293 = smul.u32 4, %s19
      $region36: #{ssf_forward.1} parent=31 // pred_fallthru
        _
    $region32: #{ssf_forward.1} parent=5 // pred_fallthru
      _
    %p294 = scmp.le.s32.totalorder 2, %s9
    // Predicated region
    $region37: #{ssf_forward.1} parent=5 // pred_check
      %p295 = pneg %p294
    $region38: #{ssf_forward.1} parent=5 // pred_check_branch
      %297 = sbr.rel (%p295) target = $region40
    $region39: #{ssf_forward.1} parent=5 // pred_region
      %s298 = ssub.s32 %s9, 2
      // Predicated region
      $region41: #{ssf_forward.1} parent=39 // pred_check
        %p299 = pneg %p132
      $region42: #{ssf_forward.1} parent=39 // pred_check_branch
        %301 = sbr.rel (%p299) target = $region44
      $region43: #{ssf_forward.1} parent=39 // pred_region
        %s302 = smul.u32 4, %s21
        %p303 = scmp.lt.s32.totalorder %s20, 0
        %s304 = scalar_select %p303, %s20, 0
        %p305 = scmp.lt.s32.totalorder %s302, 7
        %s306 = scalar_select %p305, %s302, 7
        %s307 = smul.addr %s304, 8
        %s308 = sadd.s32 %s306, %s307
        %s309 = smul.addr %s308, 2
        %s310 = scalar_lea.vmem %s3, %s309
      $region44: #{ssf_forward.1} parent=39 // pred_fallthru
        _
    $region40: #{ssf_forward.1} parent=5 // pred_fallthru
      _
  $region6: #{ssf_forward.1} parent=0 // loop_footer
    %s13 = sadd.s32 1, %s9
  $region7: #{ssf_forward.1} parent=0 // loop_footer_branch
    %8 = sbr.rel target = $region3
  $region8: #{ssf_forward.1} parent=0 // loop_exit
    _

</llo_original>
